<compile_context>
chip_gen: v6e
topology: v6e:2x2x1
jax: 0.10.0
libtpu: 0.0.40
codegen_flags: <defaults>
</compile_context>

<pallas_src>
import functools

import jax
import jax.numpy as jnp
from jax import lax
from jax.experimental import pallas as pl
from jax.experimental.pallas import tpu as pltpu


def _conv_bn_silu_kernel(x_ref, w_ref, scale_ref, shift_ref, o_ref, *, th):
    """One (image, row-tile) per grid step.

    x_ref    : (1, H, W*Cin)        f32  whole UNPADDED image, (W, Cin) flat on lanes
    w_ref    : (3, W*Cin, W*Cout)   f32  banded conv weights (one slab per kh tap),
                                         width zero-padding folded in
    scale_ref: (1, W*Cout)          f32  folded BN scale, tiled along W
    shift_ref: (1, W*Cout)          f32  folded BN shift, tiled along W
    o_ref    : (1, th, W*Cout)      f32
    """
    ht = pl.program_id(1)
    n_ht = pl.num_programs(1)
    h_total = x_ref.shape[1]
    w_cout = o_ref.shape[-1]
    r0 = pl.multiple_of(ht * th, th)              # first output row of this tile

    # One aligned slab load, three matmuls (one per kh tap), K = W*Cin, N = W*Cout.
    slab = x_ref[0, pl.ds(r0, th), :]                                   # (th, K) f32
    p0 = jnp.dot(slab, w_ref[0], preferred_element_type=jnp.float32)    # tap uses x[h-1]
    p1 = jnp.dot(slab, w_ref[1], preferred_element_type=jnp.float32)    # tap uses x[h]
    p2 = jnp.dot(slab, w_ref[2], preferred_element_type=jnp.float32)    # tap uses x[h+1]

    row = lax.broadcasted_iota(jnp.int32, (th, w_cout), 0)

    # Contribution from the row above each output row (kh=0 tap): roll down by 1;
    # the tile's first row comes from the halo row r0-1 (zero at the image top).
    top_idx = jnp.maximum(r0 - 1, 0)
    top_row = x_ref[0, pl.ds(top_idx, 1), :]                            # (1, K)
    top = jnp.dot(top_row, w_ref[0], preferred_element_type=jnp.float32)
    top = jnp.where(ht > 0, top, 0.0)
    from_above = jnp.where(row == 0, top, pltpu.roll(p0, 1, axis=0))

    # Contribution from the row below (kh=2 tap): roll up by 1 (shift th-1 == -1 mod th);
    # the tile's last row comes from the halo row r0+th (zero at the image bottom).
    bot_idx = jnp.minimum(r0 + th, h_total - 1)
    bot_row = x_ref[0, pl.ds(bot_idx, 1), :]                            # (1, K)
    bot = jnp.dot(bot_row, w_ref[2], preferred_element_type=jnp.float32)
    bot = jnp.where(ht < n_ht - 1, bot, 0.0)
    from_below = jnp.where(row == th - 1, bot, pltpu.roll(p2, th - 1, axis=0))

    # Fused BatchNorm (eval) + SiLU, f32, lane-dense; exp and reciprocal on the EUP slot.
    y = (from_above + p1 + from_below) * scale_ref[...] + shift_ref[...]
    sig = pl.reciprocal(1.0 + jnp.exp(-y), approx=True)
    o_ref[0] = (y * sig).astype(o_ref.dtype)


def _pick_row_tile(n, h):
    # Largest sublane-aligned row tile dividing H such that the grid still has >= 2
    # parallel points (keeps both v7x TensorCores fed even at batch 1); else full height.
    for th in (64, 32, 16, 8):
        if h % th == 0 and n * (h // th) >= 2:
            return th
    return h


def prepare_conv_block_params(weight_oihw, gamma, beta, running_mean, running_var,
                              W, eps=1e-5):
    """One-time prep (weights / eval running stats are static across forward calls)."""
    Cout, Cin, _, _ = weight_oihw.shape
    w_cin = W * Cin
    w_cout = W * Cout

    # Banded conv weights with the width zero-padding folded in:
    #   slab[kh][wi*Cin + ci, wo*Cout + co] = weight[co, ci, kh, kw]  with wi = wo + kw - 1
    # so out[h, wo, co] = sum_kh x[h + kh - 1] @ slab[kh]   (rows outside [0, W) are zero).
    w_hwio = jnp.transpose(weight_oihw, (2, 3, 1, 0)).astype(jnp.float32)  # (3,3,Cin,Cout)
    slabs = []
    for kh in range(3):
        m = jnp.zeros((w_cin, w_cout), jnp.float32)
        for kw in range(3):
            shift_eye = jnp.eye(W, W, k=1 - kw, dtype=jnp.float32)
            m = m + jnp.kron(shift_eye, w_hwio[kh, kw])
        slabs.append(m)
    w_band = jnp.stack(slabs)                                   # (3, W*Cin, W*Cout) f32

    # Fold BatchNorm (eval running stats) into per-lane scale/shift.
    scale_c = gamma / jnp.sqrt(running_var + eps)               # (Cout,)
    shift_c = beta - running_mean * scale_c                     # (Cout,)
    scale_l = jnp.tile(scale_c, W).reshape(1, w_cout).astype(jnp.float32)
    shift_l = jnp.tile(shift_c, W).reshape(1, w_cout).astype(jnp.float32)
    return w_band, scale_l, shift_l


def conv_block_lane_dense(x_nhc, w_band, scale_l, shift_l):
    """Lane-dense forward: (N, H, W*Cin) f32 -> (N, H, W*Cout) f32.

    Chained ConvBlocks should stay in this layout and only convert at network boundaries.
    """
    N, H, w_cin = x_nhc.shape
    w_cout = w_band.shape[-1]
    th = _pick_row_tile(N, H)

    # VMEM limit derived from actual block sizes (double-buffering + headroom), floored.
    blk_bytes = 4 * (H * w_cin + 3 * w_cin * w_cout + 2 * w_cout + th * w_cout)
    vmem_limit = min(max(4 * blk_bytes, 8 * 1024 * 1024), 64 * 1024 * 1024)

    kernel = functools.partial(_conv_bn_silu_kernel, th=th)

    return pl.pallas_call(
        kernel,
        out_shape=jax.ShapeDtypeStruct((N, H, w_cout), jnp.float32),
        grid_spec=pltpu.PrefetchScalarGridSpec(
            num_scalar_prefetch=0,
            grid=(N, H // th),
            in_specs=[
                # whole unpadded image for the current n; resident across its row tiles
                pl.BlockSpec((1, H, w_cin), lambda n, ht: (n, 0, 0)),
                pl.BlockSpec((3, w_cin, w_cout), lambda n, ht: (0, 0, 0)),
                pl.BlockSpec((1, w_cout), lambda n, ht: (0, 0)),
                pl.BlockSpec((1, w_cout), lambda n, ht: (0, 0)),
            ],
            out_specs=pl.BlockSpec((1, th, w_cout), lambda n, ht: (n, ht, 0)),
        ),
        compiler_params=pltpu.CompilerParams(
            dimension_semantics=("parallel", "parallel"),
            vmem_limit_bytes=vmem_limit),
    )(x_nhc, w_band, scale_l, shift_l)


def conv_block_pallas_nchw(x_nchw, w_band, scale_l, shift_l):
    """PyTorch-contract forward: (N, Cin, H, W) -> (N, Cout, H, W).

    The two transposes exist only at the module boundary; stacked blocks should call
    conv_block_lane_dense directly.
    """
    N, Cin, H, W = x_nchw.shape
    Cout = w_band.shape[-1] // W
    x_nhc = jnp.transpose(x_nchw, (0, 2, 3, 1)).reshape(N, H, W * Cin).astype(jnp.float32)
    y = conv_block_lane_dense(x_nhc, w_band, scale_l, shift_l)
    return jnp.transpose(y.reshape(N, H, W, Cout), (0, 3, 1, 2))


def _reference(x_nchw, weight_oihw, gamma, beta, running_mean, running_var, eps=1e-5):
    """Pure-JAX reference (lax conv) matching PyTorch eval-mode ConvBlock."""
    y = lax.conv_general_dilated(
        x_nchw, weight_oihw, window_strides=(1, 1), padding=((1, 1), (1, 1)),
        dimension_numbers=("NCHW", "OIHW", "NCHW"))
    scale = (gamma / jnp.sqrt(running_var + eps)).reshape(1, -1, 1, 1)
    shift = (beta - running_mean * gamma / jnp.sqrt(running_var + eps)).reshape(1, -1, 1, 1)
    y = y * scale + shift
    return y * jax.nn.sigmoid(y)


if __name__ == "__main__":
    key = jax.random.PRNGKey(0)
    N, Cin, H, W = 2, 4, 16, 16
    Cout = 8

    k1, k2, k3, k4, k5, k6 = jax.random.split(key, 6)
    x = jax.random.normal(k1, (N, Cin, H, W), dtype=jnp.float32)
    # Conv2d weight (out_ch, in_ch, 3, 3), no bias.
    weight = jax.random.normal(k2, (Cout, Cin, 3, 3), dtype=jnp.float32) * 0.1
    # BatchNorm2d params / running stats (eval-mode semantics).
    gamma = 1.0 + 0.1 * jax.random.normal(k3, (Cout,), dtype=jnp.float32)
    beta = 0.1 * jax.random.normal(k4, (Cout,), dtype=jnp.float32)
    running_mean = 0.1 * jax.random.normal(k5, (Cout,), dtype=jnp.float32)
    running_var = jnp.abs(1.0 + 0.1 * jax.random.normal(k6, (Cout,), dtype=jnp.float32))

    # One-time weight / BN-fold prep, hoisted out of the per-call path.
    w_band, scale_l, shift_l = prepare_conv_block_params(
        weight, gamma, beta, running_mean, running_var, W)
    w_band = jax.block_until_ready(w_band)

    fwd = jax.jit(conv_block_pallas_nchw)
    out = fwd(x, w_band, scale_l, shift_l)
    out = jax.block_until_ready(out)

    ref = _reference(x, weight, gamma, beta, running_mean, running_var)
    assert out.shape == (N, Cout, H, W)
    # f32 matmuls; remaining slack covers only the EUP approx-reciprocal in the SiLU.
    assert jnp.allclose(out, ref, atol=2e-2, rtol=2e-2), "mismatch vs reference"

    print("KERNEL_OK")
</pallas_src>

<mosaic_0001>
module attributes {stable_mosaic.version = 11 : i64} {
  func.func @_conv_bn_silu_kernel(%arg0: i32, %arg1: i32, %arg2: memref<1x16x64xf32, #tpu.memory_space<vmem>>, %arg3: memref<3x64x128xf32, #tpu.memory_space<vmem>>, %arg4: memref<1x128xf32, #tpu.memory_space<vmem>>, %arg5: memref<1x128xf32, #tpu.memory_space<vmem>>, %arg6: memref<1x16x128xf32, #tpu.memory_space<vmem>>) attributes {dimension_semantics = [#tpu.dimension_semantics<parallel>, #tpu.dimension_semantics<parallel>], iteration_bounds = array<i64: 2, 1>, scalar_prefetch = 0 : i64, scratch_operands = 0 : i64, tpu.core_type = #tpu.core_type<tc>, window_params = [{transform_indices = @transform_0, window_bounds = array<i64: 1, 16, 64>}, {pipeline_mode = #tpu.pipeline_mode<synchronous>, transform_indices = @transform_1, window_bounds = array<i64: 3, 64, 128>}, {pipeline_mode = #tpu.pipeline_mode<synchronous>, transform_indices = @transform_2, window_bounds = array<i64: 1, 128>}, {pipeline_mode = #tpu.pipeline_mode<synchronous>, transform_indices = @transform_3, window_bounds = array<i64: 1, 128>}, {transform_indices = @transform_4, window_bounds = array<i64: 1, 16, 128>}]} {
    %c16_i32 = arith.constant 16 : i32
    %0 = arith.muli %arg1, %c16_i32 : i32
    %1 = tpu.assume_multiple %0, 16 : i32
    %c0 = arith.constant 0 : index
    %2 = arith.index_cast %1 : i32 to index
    %c0_0 = arith.constant 0 : index
    %3 = vector.load %arg2[%c0, %2, %c0_0] : memref<1x16x64xf32, #tpu.memory_space<vmem>>, vector<1x16x64xf32>
    %4 = vector.shape_cast %3 : vector<1x16x64xf32> to vector<16x64xf32>
    %c0_1 = arith.constant 0 : index
    %c0_2 = arith.constant 0 : index
    %c0_3 = arith.constant 0 : index
    %5 = vector.load %arg3[%c0_1, %c0_2, %c0_3] : memref<3x64x128xf32, #tpu.memory_space<vmem>>, vector<1x64x128xf32>
    %6 = vector.shape_cast %5 : vector<1x64x128xf32> to vector<64x128xf32>
    %cst = arith.constant dense<0.000000e+00> : vector<16x128xf32>
    %7 = tpu.matmul %4, %6, %cst {dimension_numbers = #tpu.dot_dimension_numbers<[1], [0], [0], [1], [0, 0, 1, 1], [], []>} : vector<16x64xf32>, vector<64x128xf32>, vector<16x128xf32> -> vector<16x128xf32>
    %c1 = arith.constant 1 : index
    %c0_4 = arith.constant 0 : index
    %c0_5 = arith.constant 0 : index
    %8 = vector.load %arg3[%c1, %c0_4, %c0_5] : memref<3x64x128xf32, #tpu.memory_space<vmem>>, vector<1x64x128xf32>
    %9 = vector.shape_cast %8 : vector<1x64x128xf32> to vector<64x128xf32>
    %cst_6 = arith.constant dense<0.000000e+00> : vector<16x128xf32>
    %10 = tpu.matmul %4, %9, %cst_6 {dimension_numbers = #tpu.dot_dimension_numbers<[1], [0], [0], [1], [0, 0, 1, 1], [], []>} : vector<16x64xf32>, vector<64x128xf32>, vector<16x128xf32> -> vector<16x128xf32>
    %c2 = arith.constant 2 : index
    %c0_7 = arith.constant 0 : index
    %c0_8 = arith.constant 0 : index
    %11 = vector.load %arg3[%c2, %c0_7, %c0_8] : memref<3x64x128xf32, #tpu.memory_space<vmem>>, vector<1x64x128xf32>
    %12 = vector.shape_cast %11 : vector<1x64x128xf32> to vector<64x128xf32>
    %cst_9 = arith.constant dense<0.000000e+00> : vector<16x128xf32>
    %13 = tpu.matmul %4, %12, %cst_9 {dimension_numbers = #tpu.dot_dimension_numbers<[1], [0], [0], [1], [0, 0, 1, 1], [], []>} : vector<16x64xf32>, vector<64x128xf32>, vector<16x128xf32> -> vector<16x128xf32>
    %14 = tpu.iota {dimensions = array<i32: 0>} : vector<16x128xi32>
    %c1_i32 = arith.constant 1 : i32
    %15 = arith.subi %1, %c1_i32 : i32
    %c0_i32 = arith.constant 0 : i32
    %16 = arith.maxsi %15, %c0_i32 : i32
    %c0_10 = arith.constant 0 : index
    %17 = arith.index_cast %16 : i32 to index
    %c0_11 = arith.constant 0 : index
    %18 = vector.load %arg2[%c0_10, %17, %c0_11] : memref<1x16x64xf32, #tpu.memory_space<vmem>>, vector<1x1x64xf32>
    %19 = vector.shape_cast %18 : vector<1x1x64xf32> to vector<1x64xf32>
    %c0_12 = arith.constant 0 : index
    %c0_13 = arith.constant 0 : index
    %c0_14 = arith.constant 0 : index
    %20 = vector.load %arg3[%c0_12, %c0_13, %c0_14] : memref<3x64x128xf32, #tpu.memory_space<vmem>>, vector<1x64x128xf32>
    %21 = vector.shape_cast %20 : vector<1x64x128xf32> to vector<64x128xf32>
    %cst_15 = arith.constant dense<0.000000e+00> : vector<1x128xf32>
    %22 = tpu.matmul %19, %21, %cst_15 {dimension_numbers = #tpu.dot_dimension_numbers<[1], [0], [0], [1], [0, 0, 1, 1], [], []>} : vector<1x64xf32>, vector<64x128xf32>, vector<1x128xf32> -> vector<1x128xf32>
    %c0_i32_16 = arith.constant 0 : i32
    %23 = arith.cmpi sgt, %arg1, %c0_i32_16 : i32
    %cst_17 = arith.constant 0.000000e+00 : f32
    %24 = vector.broadcast %cst_17 : f32 to vector<1x128xf32>
    %25 = arith.select %23, %22, %24 : vector<1x128xf32>
    %c0_i32_18 = arith.constant 0 : i32
    %26 = vector.broadcast %c0_i32_18 : i32 to vector<16x128xi32>
    %27 = arith.cmpi eq, %14, %26 : vector<16x128xi32>
    %c1_i32_19 = arith.constant 1 : i32
    %28 = tpu.dynamic_rotate %7 by %c1_i32_19 dim 0 : vector<16x128xf32>, i32 -> vector<16x128xf32>
    %29 = vector.shape_cast %25 : vector<1x128xf32> to vector<1x128xf32>
    %30 = vector.broadcast %29 : vector<1x128xf32> to vector<16x128xf32>
    %31 = arith.select %27, %30, %28 : vector<16x128xi1>, vector<16x128xf32>
    %c16_i32_20 = arith.constant 16 : i32
    %32 = arith.addi %1, %c16_i32_20 : i32
    %c15_i32 = arith.constant 15 : i32
    %33 = arith.minsi %32, %c15_i32 : i32
    %c0_21 = arith.constant 0 : index
    %34 = arith.index_cast %33 : i32 to index
    %c0_22 = arith.constant 0 : index
    %35 = vector.load %arg2[%c0_21, %34, %c0_22] : memref<1x16x64xf32, #tpu.memory_space<vmem>>, vector<1x1x64xf32>
    %36 = vector.shape_cast %35 : vector<1x1x64xf32> to vector<1x64xf32>
    %c2_23 = arith.constant 2 : index
    %c0_24 = arith.constant 0 : index
    %c0_25 = arith.constant 0 : index
    %37 = vector.load %arg3[%c2_23, %c0_24, %c0_25] : memref<3x64x128xf32, #tpu.memory_space<vmem>>, vector<1x64x128xf32>
    %38 = vector.shape_cast %37 : vector<1x64x128xf32> to vector<64x128xf32>
    %cst_26 = arith.constant dense<0.000000e+00> : vector<1x128xf32>
    %39 = tpu.matmul %36, %38, %cst_26 {dimension_numbers = #tpu.dot_dimension_numbers<[1], [0], [0], [1], [0, 0, 1, 1], [], []>} : vector<1x64xf32>, vector<64x128xf32>, vector<1x128xf32> -> vector<1x128xf32>
    %c0_i32_27 = arith.constant 0 : i32
    %40 = arith.cmpi slt, %arg1, %c0_i32_27 : i32
    %cst_28 = arith.constant 0.000000e+00 : f32
    %41 = vector.broadcast %cst_28 : f32 to vector<1x128xf32>
    %42 = arith.select %40, %39, %41 : vector<1x128xf32>
    %c15_i32_29 = arith.constant 15 : i32
    %43 = vector.broadcast %c15_i32_29 : i32 to vector<16x128xi32>
    %44 = arith.cmpi eq, %14, %43 : vector<16x128xi32>
    %c15_i32_30 = arith.constant 15 : i32
    %45 = tpu.dynamic_rotate %13 by %c15_i32_30 dim 0 : vector<16x128xf32>, i32 -> vector<16x128xf32>
    %46 = vector.shape_cast %42 : vector<1x128xf32> to vector<1x128xf32>
    %47 = vector.broadcast %46 : vector<1x128xf32> to vector<16x128xf32>
    %48 = arith.select %44, %47, %45 : vector<16x128xi1>, vector<16x128xf32>
    %49 = arith.addf %31, %10 : vector<16x128xf32>
    %50 = arith.addf %49, %48 : vector<16x128xf32>
    %c0_31 = arith.constant 0 : index
    %c0_32 = arith.constant 0 : index
    %51 = vector.load %arg4[%c0_31, %c0_32] : memref<1x128xf32, #tpu.memory_space<vmem>>, vector<1x128xf32>
    %52 = vector.broadcast %51 : vector<1x128xf32> to vector<16x128xf32>
    %53 = arith.mulf %50, %52 : vector<16x128xf32>
    %c0_33 = arith.constant 0 : index
    %c0_34 = arith.constant 0 : index
    %54 = vector.load %arg5[%c0_33, %c0_34] : memref<1x128xf32, #tpu.memory_space<vmem>>, vector<1x128xf32>
    %55 = vector.broadcast %54 : vector<1x128xf32> to vector<16x128xf32>
    %56 = arith.addf %53, %55 : vector<16x128xf32>
    %cst_35 = arith.constant 0.000000e+00 : f32
    %57 = vector.broadcast %cst_35 : f32 to vector<16x128xf32>
    %58 = arith.subf %57, %56 : vector<16x128xf32>
    %59 = math.exp %58 : vector<16x128xf32>
    %cst_36 = arith.constant 1.000000e+00 : f32
    %60 = vector.broadcast %cst_36 : f32 to vector<16x128xf32>
    %61 = arith.addf %60, %59 : vector<16x128xf32>
    %62 = tpu.reciprocal %61 {approx = true} : vector<16x128xf32> -> vector<16x128xf32>
    %63 = arith.mulf %56, %62 : vector<16x128xf32>
    %c0_37 = arith.constant 0 : index
    %c0_38 = arith.constant 0 : index
    %c0_39 = arith.constant 0 : index
    %64 = vector.load %arg6[%c0_37, %c0_38, %c0_39] : memref<1x16x128xf32, #tpu.memory_space<vmem>>, vector<1x16x128xf32>
    %65 = vector.shape_cast %64 : vector<1x16x128xf32> to vector<16x128xf32>
    %66 = vector.shape_cast %63 : vector<16x128xf32> to vector<1x16x128xf32>
    tpu.vector_store %arg6[%c0_37, %c0_38, %c0_39], %66 {strides = array<i32>} : memref<1x16x128xf32, #tpu.memory_space<vmem>>, vector<1x16x128xf32>,
    return
  }
  func.func @transform_0(%arg0: i32, %arg1: i32) -> (i32, i32, i32) {
    %c0_i32 = arith.constant 0 : i32
    %c0_i32_0 = arith.constant 0 : i32
    %c0_i32_1 = arith.constant 0 : i32
    return %arg0, %c0_i32, %c0_i32_0 : i32, i32, i32
  }
  func.func @transform_1(%arg0: i32, %arg1: i32) -> (i32, i32, i32) {
    %c0_i32 = arith.constant 0 : i32
    %c0_i32_0 = arith.constant 0 : i32
    %c0_i32_1 = arith.constant 0 : i32
    %c0_i32_2 = arith.constant 0 : i32
    return %c0_i32, %c0_i32_0, %c0_i32_1 : i32, i32, i32
  }
  func.func @transform_2(%arg0: i32, %arg1: i32) -> (i32, i32) {
    %c0_i32 = arith.constant 0 : i32
    %c0_i32_0 = arith.constant 0 : i32
    %c0_i32_1 = arith.constant 0 : i32
    return %c0_i32, %c0_i32_0 : i32, i32
  }
  func.func @transform_3(%arg0: i32, %arg1: i32) -> (i32, i32) {
    %c0_i32 = arith.constant 0 : i32
    %c0_i32_0 = arith.constant 0 : i32
    %c0_i32_1 = arith.constant 0 : i32
    return %c0_i32, %c0_i32_0 : i32, i32
  }
  func.func @transform_4(%arg0: i32, %arg1: i32) -> (i32, i32, i32) {
    %c0_i32 = arith.constant 0 : i32
    %c0_i32_0 = arith.constant 0 : i32
    return %arg0, %arg1, %c0_i32 : i32, i32, i32
  }
}

</mosaic_0001>

<llo_original>
// kernel: conv_block_pallas_nchw.1
$region0: #{conv_block_pallas_nchw.1}
  #allocation0 [shape = 'u32[]', space=smem, size = 0x4, offset = 0x4, fixed_abs, tag = 'smem constant byte address 0x4 - core index']
  #allocation1 [shape = 'u32[144,128]{1,0:T(1,128)}', space=vmem, size = 0x12000, scoped, tag = 'internal scratch']
  %s0 = inlined_call_operand.vmem [shape: f32[2,16,64], index: 0, kind: input, shape index: {}]
  %s1 = inlined_call_operand.vmem [shape: f32[3,64,128], index: 1, kind: input, shape index: {}]
  %s2 = inlined_call_operand.vmem [shape: f32[1,128], index: 2, kind: input, shape index: {}]
  %s3 = inlined_call_operand.vmem [shape: f32[1,128], index: 3, kind: input, shape index: {}]
  %s4 = inlined_call_operand.vmem [shape: f32[2,16,128], index: 4, kind: output, shape index: {}]
  %s5 = sld [smem:[#allocation0]]
  $region49: #{conv_block_pallas_nchw.1} parent=0
    _
  %s7 = ssub.s32 1, %s5
  %s8 = scalar_select 0, %s7, %s5
  loop: start=0, step=1, limit=4
  $region2: #{conv_block_pallas_nchw.1} parent=0 // loop_pre_header
    _
  $region3: #{conv_block_pallas_nchw.1} parent=0 // loop_header
    %s10 = sphi 0, %s14
    %p11 = scmp.ge.s32.totalorder %s10, 4
    %s17 = sphi 0, %s29
    %s18 = sphi 0, %s25
    %s19 = sphi 0, %s17
    %s20 = sphi 0, %s18
    %s21 = sphi 0, %s19
    %s22 = sphi 0, %s20
    %s32 = sphi 0, %s34
    %s35 = sphi 0, %s32
    %s36 = sphi 0, %s35
    %s52 = sphi 0, %s36
    %s56 = sphi 0, %s56
    %s58 = sphi 0, %s56
    %s59 = sphi 0, %s58
    %s73 = sphi 0, %s59
    %s77 = sphi 0, %s77
    %s79 = sphi 0, %s77
    %s80 = sphi 0, %s79
    %s94 = sphi 0, %s80
    %s98 = sphi 0, %s98
    %s100 = sphi 0, %s98
    %s101 = sphi 0, %s100
    %s115 = sphi 0, %s101
    %s123 = sphi 0, %s125
    %s126 = sphi 0, %s123
    %s127 = sphi 0, %s126
    %s143 = sphi 0, %s127
  $region4: #{conv_block_pallas_nchw.1} parent=0 // loop_header_branch
    %13 = sbr.rel (%p11) target = $region8
  $region5: #{conv_block_pallas_nchw.1} parent=0 // loop_body
    %s15 = ssub.s32 %s10, 1
    %s16 = ssub.s32 %s10, 2
    %s23 = sadd.s32 1, %s18
    %p24 = scmp.ge.s32.totalorder %s23, 1
    %s25 = scalar_select %p24, 0, %s23
    %s26 = sadd.s32 1, %s17
    %s27 = scalar_select %p24, %s26, %s17
    %p28 = scmp.ge.s32.totalorder %s27, 2
    %s29 = scalar_select %p28, 0, %s27
    %s30 = ssub.s32 %s17, %s29
    %p31 = scmp.eq.s32.totalorder %s30, 0
    %s33 = sadd.s32 %s32, 1
    %s34 = scalar_select %p31, %s32, %s33
    %p37 = pneg %p31
    %p38 = scmp.eq.s32.totalorder %s10, 1
    %p39 = por %p37, %p38
    %p40 = scmp.ne.s32.totalorder %s32, %s35
    %p41 = scmp.eq.s32.totalorder %s10, 0
    %p42 = por %p40, %p41
    %p43 = scmp.ne.s32.totalorder %s32, %s35
    %p44 = scmp.eq.s32.totalorder %s15, 1
    %p45 = por %p43, %p44
    %p46 = scmp.ne.s32.totalorder %s35, %s36
    %p47 = scmp.eq.s32.totalorder %s15, 0
    %p48 = por %p46, %p47
    %p49 = scmp.ne.s32.totalorder %s35, %s36
    %p50 = scmp.eq.s32.totalorder %s16, 1
    %p51 = por %p49, %p50
    %p53 = scmp.ne.s32.totalorder %s36, %s52
    %p54 = scmp.eq.s32.totalorder %s16, 0
    %p55 = por %p53, %p54
    %s57 = sadd.s32 %s56, 1
    %p60 = scmp.eq.s32.totalorder %s10, 1
    %p61 = scmp.ne.s32.totalorder %s56, %s58
    %p62 = scmp.eq.s32.totalorder %s10, 0
    %p63 = por %p61, %p62
    %p64 = scmp.ne.s32.totalorder %s56, %s58
    %p65 = scmp.eq.s32.totalorder %s15, 1
    %p66 = por %p64, %p65
    %p67 = scmp.ne.s32.totalorder %s58, %s59
    %p68 = scmp.eq.s32.totalorder %s15, 0
    %p69 = por %p67, %p68
    %p70 = scmp.ne.s32.totalorder %s58, %s59
    %p71 = scmp.eq.s32.totalorder %s16, 1
    %p72 = por %p70, %p71
    %p74 = scmp.ne.s32.totalorder %s59, %s73
    %p75 = scmp.eq.s32.totalorder %s16, 0
    %p76 = por %p74, %p75
    %s78 = sadd.s32 %s77, 1
    %p81 = scmp.eq.s32.totalorder %s10, 1
    %p82 = scmp.ne.s32.totalorder %s77, %s79
    %p83 = scmp.eq.s32.totalorder %s10, 0
    %p84 = por %p82, %p83
    %p85 = scmp.ne.s32.totalorder %s77, %s79
    %p86 = scmp.eq.s32.totalorder %s15, 1
    %p87 = por %p85, %p86
    %p88 = scmp.ne.s32.totalorder %s79, %s80
    %p89 = scmp.eq.s32.totalorder %s15, 0
    %p90 = por %p88, %p89
    %p91 = scmp.ne.s32.totalorder %s79, %s80
    %p92 = scmp.eq.s32.totalorder %s16, 1
    %p93 = por %p91, %p92
    %p95 = scmp.ne.s32.totalorder %s80, %s94
    %p96 = scmp.eq.s32.totalorder %s16, 0
    %p97 = por %p95, %p96
    %s99 = sadd.s32 %s98, 1
    %p102 = scmp.eq.s32.totalorder %s10, 1
    %p103 = scmp.ne.s32.totalorder %s98, %s100
    %p104 = scmp.eq.s32.totalorder %s10, 0
    %p105 = por %p103, %p104
    %p106 = scmp.ne.s32.totalorder %s98, %s100
    %p107 = scmp.eq.s32.totalorder %s15, 1
    %p108 = por %p106, %p107
    %p109 = scmp.ne.s32.totalorder %s100, %s101
    %p110 = scmp.eq.s32.totalorder %s15, 0
    %p111 = por %p109, %p110
    %p112 = scmp.ne.s32.totalorder %s100, %s101
    %p113 = scmp.eq.s32.totalorder %s16, 1
    %p114 = por %p112, %p113
    %p116 = scmp.ne.s32.totalorder %s101, %s115
    %p117 = scmp.eq.s32.totalorder %s16, 0
    %p118 = por %p116, %p117
    %s119 = ssub.s32 %s17, %s29
    %s120 = ssub.s32 %s18, %s25
    %s121 = sor.u32 %s119, %s120
    %p122 = scmp.eq.s32.totalorder %s121, 0
    %s124 = sadd.s32 %s123, 1
    %s125 = scalar_select %p122, %s123, %s124
    %p128 = pneg %p122
    %p129 = scmp.eq.s32.totalorder %s10, 1
    %p130 = por %p128, %p129
    %p131 = scmp.ne.s32.totalorder %s123, %s126
    %p132 = scmp.eq.s32.totalorder %s10, 0
    %p133 = por %p131, %p132
    %p134 = scmp.ne.s32.totalorder %s123, %s126
    %p135 = scmp.eq.s32.totalorder %s15, 1
    %p136 = por %p134, %p135
    %p137 = scmp.ne.s32.totalorder %s126, %s127
    %p138 = scmp.eq.s32.totalorder %s15, 0
    %p139 = por %p137, %p138
    %p140 = scmp.ne.s32.totalorder %s126, %s127
    %p141 = scmp.eq.s32.totalorder %s16, 1
    %p142 = por %p140, %p141
    %p144 = scmp.ne.s32.totalorder %s127, %s143
    %p145 = scmp.eq.s32.totalorder %s16, 0
    %p146 = por %p144, %p145
    %p147 = scmp.le.s32.totalorder 1, %s10
    %p148 = scmp.lt.s32.totalorder %s10, 3
    %p149 = pnand %p147, %p148
    %p150 = pneg %p149
    // Predicated region
    $region9: #{conv_block_pallas_nchw.1} parent=5 // pred_check
      _
    $region10: #{conv_block_pallas_nchw.1} parent=5 // pred_check_branch
      %152 = sbr.rel (%p149) target = $region12
    $region11: #{conv_block_pallas_nchw.1} parent=5 // pred_region
      %s153 = ssub.s32 %s10, 1
      // Predicated region
      $region13: #{conv_block_pallas_nchw.1} parent=11 // pred_check
        %p154 = pneg %p69
      $region14: #{conv_block_pallas_nchw.1} parent=11 // pred_check_branch
        %156 = sbr.rel (%p154) target = $region16
      $region15: #{conv_block_pallas_nchw.1} parent=11 // pred_region
        _
      $region16: #{conv_block_pallas_nchw.1} parent=11 // pred_fallthru
        _
      // Predicated region
      $region17: #{conv_block_pallas_nchw.1} parent=11 // pred_check
        %p157 = pneg %p90
      $region18: #{conv_block_pallas_nchw.1} parent=11 // pred_check_branch
        %159 = sbr.rel (%p157) target = $region20
      $region19: #{conv_block_pallas_nchw.1} parent=11 // pred_region
        _
      $region20: #{conv_block_pallas_nchw.1} parent=11 // pred_fallthru
        _
      // Predicated region
      $region21: #{conv_block_pallas_nchw.1} parent=11 // pred_check
        %p160 = pneg %p111
      $region22: #{conv_block_pallas_nchw.1} parent=11 // pred_check_branch
        %162 = sbr.rel (%p160) target = $region24
      $region23: #{conv_block_pallas_nchw.1} parent=11 // pred_region
        _
      $region24: #{conv_block_pallas_nchw.1} parent=11 // pred_fallthru
        _
    $region12: #{conv_block_pallas_nchw.1} parent=5 // pred_fallthru
      _
    %p163 = scmp.lt.s32.totalorder %s10, 2
    // Predicated region
    $region25: #{conv_block_pallas_nchw.1} parent=5 // pred_check
      %p164 = pneg %p163
    $region26: #{conv_block_pallas_nchw.1} parent=5 // pred_check_branch
      %166 = sbr.rel (%p164) target = $region28
    $region27: #{conv_block_pallas_nchw.1} parent=5 // pred_region
      // Predicated region
      $region29: #{conv_block_pallas_nchw.1} parent=27 // pred_check
        %p167 = pneg %p42
      $region30: #{conv_block_pallas_nchw.1} parent=27 // pred_check_branch
        %169 = sbr.rel (%p167) target = $region32
      $region31: #{conv_block_pallas_nchw.1} parent=27 // pred_region
        %p170 = scmp.lt.s32.totalorder %s17, 1
        %s171 = scalar_select %p170, %s17, 1
        %s172 = smul.addr %s171, 2
        %s173 = smul.addr %s172, 8
        %s174 = scalar_lea.vmem %s0, %s173
      $region32: #{conv_block_pallas_nchw.1} parent=27 // pred_fallthru
        _
    $region28: #{conv_block_pallas_nchw.1} parent=5 // pred_fallthru
      _
    %p175 = scmp.le.s32.totalorder 1, %s10
    %p176 = scmp.lt.s32.totalorder %s10, 3
    %p177 = pnand %p175, %p176
    %p178 = pneg %p177
    // Predicated region
    $region33: #{conv_block_pallas_nchw.1} parent=5 // pred_check
      _
    $region34: #{conv_block_pallas_nchw.1} parent=5 // pred_check_branch
      %180 = sbr.rel (%p177) target = $region36
    $region35: #{conv_block_pallas_nchw.1} parent=5 // pred_region
      %s181 = ssub.s32 %s10, 1
      %p182 = scmp.lt.s32.totalorder %s19, 1
      %s183 = scalar_select %p182, %s19, 1
      %s184 = smul.addr %s183, 2
      %s185 = smul.addr %s184, 8
      %s186 = scalar_lea.vmem %s0, %s185
      %p187 = pneg %p48
      %p188 = pneg %p45
      %p189 = pneg %p69
      %p190 = pneg %p66
      %p191 = pneg %p90
      %p192 = pneg %p87
      %p193 = pneg %p111
      %p194 = pneg %p108
      %p195 = pneg %p139
      %p196 = pneg %p136
      %s197 = smul.u32 2, %s20
      %p198 = scmp.lt.s32.totalorder %s19, 1
      %s199 = scalar_select %p198, %s19, 1
      %p200 = scmp.lt.s32.totalorder %s197, 1
      %s201 = scalar_select %p200, %s197, 1
      %s202 = smul.addr %s199, 2
      %s203 = sadd.s32 %s201, %s202
      %s204 = smul.addr %s203, 8
      %s205 = scalar_lea.vmem %s4, %s204
      %p206 = scmp.lt.s32.totalorder %s19, 1
      %s207 = scalar_select %p206, %s19, 1
      %s208 = smul.addr %s207, 2
      %s209 = smul.addr %s208, 8
      %s210 = scalar_lea.vmem %s0, %s209
      %s211 = smul.u32 2, %s20
      %p212 = scmp.lt.s32.totalorder %s19, 1
      %s213 = scalar_select %p212, %s19, 1
      %p214 = scmp.lt.s32.totalorder %s211, 1
      %s215 = scalar_select %p214, %s211, 1
      %s216 = smul.addr %s213, 2
      %s217 = sadd.s32 %s215, %s216
      %s218 = smul.addr %s217, 8
      %s219 = scalar_lea.vmem %s4, %s218
      %s220 = smul.u32 2, %s20
      %s221 = smul.u32 %s20, 16
      %s222 = scalar_lea.vmem %s210, %s221
      %v223 = vld [vmem:[%s222] sm:$0xff]
      %v224 = vld [vmem:[%s222 + $0x8] sm:$0xff]
      %v225 = vld [vmem:[%s1] sm:$0xff]
      %v226 = vld [vmem:[%s1 + $0x8] sm:$0xff]
      %v227 = vld [vmem:[%s1 + $0x10] sm:$0xff]
      %v228 = vld [vmem:[%s1 + $0x18] sm:$0xff]
      %v229 = vld [vmem:[%s1 + $0x20] sm:$0xff]
      %v230 = vld [vmem:[%s1 + $0x28] sm:$0xff]
      %v231 = vld [vmem:[%s1 + $0x30] sm:$0xff]
      %v232 = vld [vmem:[%s1 + $0x38] sm:$0xff]
      %vm233 = vcmask 523264
      %v235 = vsel %vm233, %v223, 0
      %v238 = vsel %vm233, %v224, 0
      %240 = vmatprep.subr.mxu0 0.0
      %241 = vmatpush1.msra.mxu0 0.0
      %242 = vmatprep.subr.mxu0 0.0
      %243 = vmatpush1.msra.mxu0 0.0
      %244 = vmatprep.subr.mxu0 0.0
      %245 = vmatpush1.msra.mxu0 0.0
      %246 = vmatprep.subr.mxu0 0.0
      %247 = vmatpush1.msra.mxu0 0.0
      %248 = vmatprep.subr.mxu0 0.0
      %249 = vmatpush1.msra.mxu0 0.0
      %250 = vmatprep.subr.mxu0 0.0
      %251 = vmatpush1.msra.mxu0 0.0
      %252 = vmatprep.subr.mxu0 0.0
      %253 = vmatpush1.msra.mxu0 0.0
      %254 = vmatprep.subr.mxu0 0.0
      %255 = vmatpush1.msra.mxu0 0.0
      %256 = vmatprep.subr.mxu0 0.0
      %257 = vmatpush1.msra.mxu0 %v232
      %258 = vmatprep.subr.mxu0 0.0
      %259 = vmatpush1.msra.mxu0 %v231
      %260 = vmatprep.subr.mxu0 0.0
      %261 = vmatpush1.msra.mxu0 %v230
      %262 = vmatprep.subr.mxu0 0.0
      %263 = vmatpush1.msra.mxu0 %v229
      %264 = vmatprep.subr.mxu0 0.0
      %265 = vmatpush1.msra.mxu0 %v228
      %266 = vmatprep.subr.mxu0 0.0
      %267 = vmatpush1.msra.mxu0 %v227
      %268 = vmatprep.subr.mxu0 0.0
      %269 = vmatpush1.msra.mxu0 %v226
      %270 = vmatprep.subr.mxu0 0.0
      %271 = vmatpush1.msra.mxu0 %v225
      %272 = vmatprep.subr.mxu0 0.0
      %273 = vmatpush2.msra.mxu0 0.0
      %274 = vmatprep.subr.mxu0 0.0
      %275 = vmatpush2.msra.mxu0 0.0
      %276 = vmatprep.subr.mxu0 0.0
      %277 = vmatpush2.msra.mxu0 0.0
      %278 = vmatprep.subr.mxu0 0.0
      %279 = vmatpush2.msra.mxu0 0.0
      %280 = vmatprep.subr.mxu0 0.0
      %281 = vmatpush2.msra.mxu0 0.0
      %282 = vmatprep.subr.mxu0 0.0
      %283 = vmatpush2.msra.mxu0 0.0
      %284 = vmatprep.subr.mxu0 0.0
      %285 = vmatpush2.msra.mxu0 0.0
      %286 = vmatprep.subr.mxu0 0.0
      %287 = vmatpush2.msra.mxu0 0.0
      %288 = vmatprep.subr.mxu0 0.0
      %289 = vmatpush2.msra.mxu0 0.0
      %290 = vmatprep.subr.mxu0 0.0
      %291 = vmatpush2.msra.mxu0 0.0
      %292 = vmatprep.subr.mxu0 0.0
      %293 = vmatpush2.msra.mxu0 0.0
      %294 = vmatprep.subr.mxu0 0.0
      %295 = vmatpush2.msra.mxu0 0.0
      %296 = vmatprep.subr.mxu0 0.0
      %297 = vmatpush2.msra.mxu0 0.0
      %298 = vmatprep.subr.mxu0 0.0
      %299 = vmatpush2.msra.mxu0 0.0
      %300 = vmatprep.subr.mxu0 0.0
      %301 = vmatpush2.msra.mxu0 0.0
      %302 = vmatprep.subr.mxu0 0.0
      %303 = vmatpush2.msra.mxu0 0.0
      %304 = vmatprep.mubr.f32.mxu0 0.0
      %305 = vmatmul.mubr.f32.gmra.mxu0 %v235
      %v306 = vpop.f32.mrf.mxu0
      %v307 = vadd.f32 0.0, %v306
      %v308 = vpop.f32.mrf.mxu0
      %309 = vmatprep.mubr.f32.mxu0 0.0
      %310 = vmatmul.mubr.f32.gmra.mxu0 %v238
      %v311 = vpop.f32.mrf.mxu0
      %v312 = vadd.f32 0.0, %v311
      %v313 = vpop.f32.mrf.mxu0
      %314 = vdwg.mxu0
      %s315 = scalar_lea.vmem %s1, 64
      %v316 = vld [vmem:[%s315] sm:$0xff]
      %v317 = vld [vmem:[%s315 + $0x8] sm:$0xff]
      %v318 = vld [vmem:[%s315 + $0x10] sm:$0xff]
      %v319 = vld [vmem:[%s315 + $0x18] sm:$0xff]
      %v320 = vld [vmem:[%s315 + $0x20] sm:$0xff]
      %v321 = vld [vmem:[%s315 + $0x28] sm:$0xff]
      %v322 = vld [vmem:[%s315 + $0x30] sm:$0xff]
      %v323 = vld [vmem:[%s315 + $0x38] sm:$0xff]
      %324 = vmatprep.subr.mxu0 0.0
      %325 = vmatpush1.msra.mxu0 0.0
      %326 = vmatprep.subr.mxu0 0.0
      %327 = vmatpush1.msra.mxu0 0.0
      %328 = vmatprep.subr.mxu0 0.0
      %329 = vmatpush1.msra.mxu0 0.0
      %330 = vmatprep.subr.mxu0 0.0
      %331 = vmatpush1.msra.mxu0 0.0
      %332 = vmatprep.subr.mxu0 0.0
      %333 = vmatpush1.msra.mxu0 0.0
      %334 = vmatprep.subr.mxu0 0.0
      %335 = vmatpush1.msra.mxu0 0.0
      %336 = vmatprep.subr.mxu0 0.0
      %337 = vmatpush1.msra.mxu0 0.0
      %338 = vmatprep.subr.mxu0 0.0
      %339 = vmatpush1.msra.mxu0 0.0
      %340 = vmatprep.subr.mxu0 0.0
      %341 = vmatpush1.msra.mxu0 %v323
      %342 = vmatprep.subr.mxu0 0.0
      %343 = vmatpush1.msra.mxu0 %v322
      %344 = vmatprep.subr.mxu0 0.0
      %345 = vmatpush1.msra.mxu0 %v321
      %346 = vmatprep.subr.mxu0 0.0
      %347 = vmatpush1.msra.mxu0 %v320
      %348 = vmatprep.subr.mxu0 0.0
      %349 = vmatpush1.msra.mxu0 %v319
      %350 = vmatprep.subr.mxu0 0.0
      %351 = vmatpush1.msra.mxu0 %v318
      %352 = vmatprep.subr.mxu0 0.0
      %353 = vmatpush1.msra.mxu0 %v317
      %354 = vmatprep.subr.mxu0 0.0
      %355 = vmatpush1.msra.mxu0 %v316
      %356 = vmatprep.subr.mxu0 0.0
      %357 = vmatpush2.msra.mxu0 0.0
      %358 = vmatprep.subr.mxu0 0.0
      %359 = vmatpush2.msra.mxu0 0.0
      %360 = vmatprep.subr.mxu0 0.0
      %361 = vmatpush2.msra.mxu0 0.0
      %362 = vmatprep.subr.mxu0 0.0
      %363 = vmatpush2.msra.mxu0 0.0
      %364 = vmatprep.subr.mxu0 0.0
      %365 = vmatpush2.msra.mxu0 0.0
      %366 = vmatprep.subr.mxu0 0.0
      %367 = vmatpush2.msra.mxu0 0.0
      %368 = vmatprep.subr.mxu0 0.0
      %369 = vmatpush2.msra.mxu0 0.0
      %370 = vmatprep.subr.mxu0 0.0
      %371 = vmatpush2.msra.mxu0 0.0
      %372 = vmatprep.subr.mxu0 0.0
      %373 = vmatpush2.msra.mxu0 0.0
      %374 = vmatprep.subr.mxu0 0.0
      %375 = vmatpush2.msra.mxu0 0.0
      %376 = vmatprep.subr.mxu0 0.0
      %377 = vmatpush2.msra.mxu0 0.0
      %378 = vmatprep.subr.mxu0 0.0
      %379 = vmatpush2.msra.mxu0 0.0
      %380 = vmatprep.subr.mxu0 0.0
      %381 = vmatpush2.msra.mxu0 0.0
      %382 = vmatprep.subr.mxu0 0.0
      %383 = vmatpush2.msra.mxu0 0.0
      %384 = vmatprep.subr.mxu0 0.0
      %385 = vmatpush2.msra.mxu0 0.0
      %386 = vmatprep.subr.mxu0 0.0
      %387 = vmatpush2.msra.mxu0 0.0
      %388 = vmatprep.mubr.f32.mxu0 0.0
      %389 = vmatmul.mubr.f32.gmra.mxu0 %v235
      %v390 = vpop.f32.mrf.mxu0
      %v391 = vadd.f32 0.0, %v390
      %v392 = vpop.f32.mrf.mxu0
      %393 = vmatprep.mubr.f32.mxu0 0.0
      %394 = vmatmul.mubr.f32.gmra.mxu0 %v238
      %v395 = vpop.f32.mrf.mxu0
      %v396 = vadd.f32 0.0, %v395
      %v397 = vpop.f32.mrf.mxu0
      %398 = vdwg.mxu0
      %s399 = scalar_lea.vmem %s1, 128
      %v400 = vld [vmem:[%s399] sm:$0xff]
      %v401 = vld [vmem:[%s399 + $0x8] sm:$0xff]
      %v402 = vld [vmem:[%s399 + $0x10] sm:$0xff]
      %v403 = vld [vmem:[%s399 + $0x18] sm:$0xff]
      %v404 = vld [vmem:[%s399 + $0x20] sm:$0xff]
      %v405 = vld [vmem:[%s399 + $0x28] sm:$0xff]
      %v406 = vld [vmem:[%s399 + $0x30] sm:$0xff]
      %v407 = vld [vmem:[%s399 + $0x38] sm:$0xff]
      %408 = vmatprep.subr.mxu0 0.0
      %409 = vmatpush1.msra.mxu0 0.0
      %410 = vmatprep.subr.mxu0 0.0
      %411 = vmatpush1.msra.mxu0 0.0
      %412 = vmatprep.subr.mxu0 0.0
      %413 = vmatpush1.msra.mxu0 0.0
      %414 = vmatprep.subr.mxu0 0.0
      %415 = vmatpush1.msra.mxu0 0.0
      %416 = vmatprep.subr.mxu0 0.0
      %417 = vmatpush1.msra.mxu0 0.0
      %418 = vmatprep.subr.mxu0 0.0
      %419 = vmatpush1.msra.mxu0 0.0
      %420 = vmatprep.subr.mxu0 0.0
      %421 = vmatpush1.msra.mxu0 0.0
      %422 = vmatprep.subr.mxu0 0.0
      %423 = vmatpush1.msra.mxu0 0.0
      %424 = vmatprep.subr.mxu0 0.0
      %425 = vmatpush1.msra.mxu0 %v407
      %426 = vmatprep.subr.mxu0 0.0
      %427 = vmatpush1.msra.mxu0 %v406
      %428 = vmatprep.subr.mxu0 0.0
      %429 = vmatpush1.msra.mxu0 %v405
      %430 = vmatprep.subr.mxu0 0.0
      %431 = vmatpush1.msra.mxu0 %v404
      %432 = vmatprep.subr.mxu0 0.0
      %433 = vmatpush1.msra.mxu0 %v403
      %434 = vmatprep.subr.mxu0 0.0
      %435 = vmatpush1.msra.mxu0 %v402
      %436 = vmatprep.subr.mxu0 0.0
      %437 = vmatpush1.msra.mxu0 %v401
      %438 = vmatprep.subr.mxu0 0.0
      %439 = vmatpush1.msra.mxu0 %v400
      %440 = vmatprep.subr.mxu0 0.0
      %441 = vmatpush2.msra.mxu0 0.0
      %442 = vmatprep.subr.mxu0 0.0
      %443 = vmatpush2.msra.mxu0 0.0
      %444 = vmatprep.subr.mxu0 0.0
      %445 = vmatpush2.msra.mxu0 0.0
      %446 = vmatprep.subr.mxu0 0.0
      %447 = vmatpush2.msra.mxu0 0.0
      %448 = vmatprep.subr.mxu0 0.0
      %449 = vmatpush2.msra.mxu0 0.0
      %450 = vmatprep.subr.mxu0 0.0
      %451 = vmatpush2.msra.mxu0 0.0
      %452 = vmatprep.subr.mxu0 0.0
      %453 = vmatpush2.msra.mxu0 0.0
      %454 = vmatprep.subr.mxu0 0.0
      %455 = vmatpush2.msra.mxu0 0.0
      %456 = vmatprep.subr.mxu0 0.0
      %457 = vmatpush2.msra.mxu0 0.0
      %458 = vmatprep.subr.mxu0 0.0
      %459 = vmatpush2.msra.mxu0 0.0
      %460 = vmatprep.subr.mxu0 0.0
      %461 = vmatpush2.msra.mxu0 0.0
      %462 = vmatprep.subr.mxu0 0.0
      %463 = vmatpush2.msra.mxu0 0.0
      %464 = vmatprep.subr.mxu0 0.0
      %465 = vmatpush2.msra.mxu0 0.0
      %466 = vmatprep.subr.mxu0 0.0
      %467 = vmatpush2.msra.mxu0 0.0
      %468 = vmatprep.subr.mxu0 0.0
      %469 = vmatpush2.msra.mxu0 0.0
      %470 = vmatprep.subr.mxu0 0.0
      %471 = vmatpush2.msra.mxu0 0.0
      %472 = vmatprep.mubr.f32.mxu0 0.0
      %473 = vmatmul.mubr.f32.gmra.mxu0 %v235
      %v474 = vpop.f32.mrf.mxu0
      %v475 = vadd.f32 0.0, %v474
      %v476 = vpop.f32.mrf.mxu0
      %477 = vmatprep.mubr.f32.mxu0 0.0
      %478 = vmatmul.mubr.f32.gmra.mxu0 %v238
      %v479 = vpop.f32.mrf.mxu0
      %v480 = vadd.f32 0.0, %v479
      %v481 = vpop.f32.mrf.mxu0
      %482 = vdwg.mxu0
      %v483 = vlaneseq
      %v484 = vshrl.u32 %v483, 7
      %v485 = vadd.s32 %v484, 8
      %s486 = ssub.s32 %s221, 1
      %p487 = scmp.gt.s32.totalorder %s486, 0
      %s488 = scalar_select %p487, %s486, 0
      %s489 = scalar_lea.vmem %s210, %s488
      %v490 = vld [vmem:[%s489] sm:$0x1]
      %v492 = vsel %vm233, %v490, 0
      %494 = vmatprep.subr.mxu0 0.0
      %495 = vmatpush1.msra.mxu0 0.0
      %496 = vmatprep.subr.mxu0 0.0
      %497 = vmatpush1.msra.mxu0 0.0
      %498 = vmatprep.subr.mxu0 0.0
      %499 = vmatpush1.msra.mxu0 0.0
      %500 = vmatprep.subr.mxu0 0.0
      %501 = vmatpush1.msra.mxu0 0.0
      %502 = vmatprep.subr.mxu0 0.0
      %503 = vmatpush1.msra.mxu0 0.0
      %504 = vmatprep.subr.mxu0 0.0
      %505 = vmatpush1.msra.mxu0 0.0
      %506 = vmatprep.subr.mxu0 0.0
      %507 = vmatpush1.msra.mxu0 0.0
      %508 = vmatprep.subr.mxu0 0.0
      %509 = vmatpush1.msra.mxu0 0.0
      %510 = vmatprep.subr.mxu0 0.0
      %511 = vmatpush1.msra.mxu0 %v232
      %512 = vmatprep.subr.mxu0 0.0
      %513 = vmatpush1.msra.mxu0 %v231
      %514 = vmatprep.subr.mxu0 0.0
      %515 = vmatpush1.msra.mxu0 %v230
      %516 = vmatprep.subr.mxu0 0.0
      %517 = vmatpush1.msra.mxu0 %v229
      %518 = vmatprep.subr.mxu0 0.0
      %519 = vmatpush1.msra.mxu0 %v228
      %520 = vmatprep.subr.mxu0 0.0
      %521 = vmatpush1.msra.mxu0 %v227
      %522 = vmatprep.subr.mxu0 0.0
      %523 = vmatpush1.msra.mxu0 %v226
      %524 = vmatprep.subr.mxu0 0.0
      %525 = vmatpush1.msra.mxu0 %v225
      %526 = vmatprep.subr.mxu0 0.0
      %527 = vmatpush2.msra.mxu0 0.0
      %528 = vmatprep.subr.mxu0 0.0
      %529 = vmatpush2.msra.mxu0 0.0
      %530 = vmatprep.subr.mxu0 0.0
      %531 = vmatpush2.msra.mxu0 0.0
      %532 = vmatprep.subr.mxu0 0.0
      %533 = vmatpush2.msra.mxu0 0.0
      %534 = vmatprep.subr.mxu0 0.0
      %535 = vmatpush2.msra.mxu0 0.0
      %536 = vmatprep.subr.mxu0 0.0
      %537 = vmatpush2.msra.mxu0 0.0
      %538 = vmatprep.subr.mxu0 0.0
      %539 = vmatpush2.msra.mxu0 0.0
      %540 = vmatprep.subr.mxu0 0.0
      %541 = vmatpush2.msra.mxu0 0.0
      %542 = vmatprep.subr.mxu0 0.0
      %543 = vmatpush2.msra.mxu0 0.0
      %544 = vmatprep.subr.mxu0 0.0
      %545 = vmatpush2.msra.mxu0 0.0
      %546 = vmatprep.subr.mxu0 0.0
      %547 = vmatpush2.msra.mxu0 0.0
      %548 = vmatprep.subr.mxu0 0.0
      %549 = vmatpush2.msra.mxu0 0.0
      %550 = vmatprep.subr.mxu0 0.0
      %551 = vmatpush2.msra.mxu0 0.0
      %552 = vmatprep.subr.mxu0 0.0
      %553 = vmatpush2.msra.mxu0 0.0
      %554 = vmatprep.subr.mxu0 0.0
      %555 = vmatpush2.msra.mxu0 0.0
      %556 = vmatprep.subr.mxu0 0.0
      %557 = vmatpush2.msra.mxu0 0.0
      %558 = vmatprep.mubr.f32.mxu0 0.0
      %559 = vmatmul.mubr.f32.gmra.mxu0 %v492
      %v560 = vpop.f32.mrf.mxu0
      %v561 = vadd.f32 0.0, %v560
      %v562 = vpop.f32.mrf.mxu0
      %563 = vdwg.mxu0
      %p564 = scmp.gt.s32.totalorder %s20, 0
      %s565 = scalar_select %p564, 1, 0
      %v566 = vstv %s565
      %vm567 = vcmp.eq.s32.totalorder %v566, 1
      %v568 = vsel %vm567, %v561, 0.0
      %vm569 = vcmp.eq.s32.totalorder %v484, 0
      %vm570 = vcmp.eq.s32.totalorder %v485, 0
      %v571 = vrot.slane %v307, 7
      %v572 = vrot.slane %v312, 7
      %vm573 = vcmp.lt.s32.totalorder %v484, 1
      %v574 = vsel %vm573, %v571, %v572
      %v575 = vsel %vm573, %v572, %v571
      %v576 = vlaneseq
      %v577 = vshrl.u32 %v576, 7
      %v578 = vsub.s32 0, %v577
      %v579 = vrot.slane %v568, %v578
      %v580 = vsel %vm569, %v579, %v575
      %v581 = vsel %vm570, %v579, %v574
      %s582 = sadd.s32 %s221, 16
      %p583 = scmp.lt.s32.totalorder %s582, 15
      %s584 = scalar_select %p583, %s582, 15
      %s585 = scalar_lea.vmem %s210, %s584
      %v586 = vld [vmem:[%s585] sm:$0x1]
      %v588 = vsel %vm233, %v586, 0
      %590 = vmatprep.subr.mxu0 0.0
      %591 = vmatpush1.msra.mxu0 0.0
      %592 = vmatprep.subr.mxu0 0.0
      %593 = vmatpush1.msra.mxu0 0.0
      %594 = vmatprep.subr.mxu0 0.0
      %595 = vmatpush1.msra.mxu0 0.0
      %596 = vmatprep.subr.mxu0 0.0
      %597 = vmatpush1.msra.mxu0 0.0
      %598 = vmatprep.subr.mxu0 0.0
      %599 = vmatpush1.msra.mxu0 0.0
      %600 = vmatprep.subr.mxu0 0.0
      %601 = vmatpush1.msra.mxu0 0.0
      %602 = vmatprep.subr.mxu0 0.0
      %603 = vmatpush1.msra.mxu0 0.0
      %604 = vmatprep.subr.mxu0 0.0
      %605 = vmatpush1.msra.mxu0 0.0
      %606 = vmatprep.subr.mxu0 0.0
      %607 = vmatpush1.msra.mxu0 %v407
      %608 = vmatprep.subr.mxu0 0.0
      %609 = vmatpush1.msra.mxu0 %v406
      %610 = vmatprep.subr.mxu0 0.0
      %611 = vmatpush1.msra.mxu0 %v405
      %612 = vmatprep.subr.mxu0 0.0
      %613 = vmatpush1.msra.mxu0 %v404
      %614 = vmatprep.subr.mxu0 0.0
      %615 = vmatpush1.msra.mxu0 %v403
      %616 = vmatprep.subr.mxu0 0.0
      %617 = vmatpush1.msra.mxu0 %v402
      %618 = vmatprep.subr.mxu0 0.0
      %619 = vmatpush1.msra.mxu0 %v401
      %620 = vmatprep.subr.mxu0 0.0
      %621 = vmatpush1.msra.mxu0 %v400
      %622 = vmatprep.subr.mxu0 0.0
      %623 = vmatpush2.msra.mxu0 0.0
      %624 = vmatprep.subr.mxu0 0.0
      %625 = vmatpush2.msra.mxu0 0.0
      %626 = vmatprep.subr.mxu0 0.0
      %627 = vmatpush2.msra.mxu0 0.0
      %628 = vmatprep.subr.mxu0 0.0
      %629 = vmatpush2.msra.mxu0 0.0
      %630 = vmatprep.subr.mxu0 0.0
      %631 = vmatpush2.msra.mxu0 0.0
      %632 = vmatprep.subr.mxu0 0.0
      %633 = vmatpush2.msra.mxu0 0.0
      %634 = vmatprep.subr.mxu0 0.0
      %635 = vmatpush2.msra.mxu0 0.0
      %636 = vmatprep.subr.mxu0 0.0
      %637 = vmatpush2.msra.mxu0 0.0
      %638 = vmatprep.subr.mxu0 0.0
      %639 = vmatpush2.msra.mxu0 0.0
      %640 = vmatprep.subr.mxu0 0.0
      %641 = vmatpush2.msra.mxu0 0.0
      %642 = vmatprep.subr.mxu0 0.0
      %643 = vmatpush2.msra.mxu0 0.0
      %644 = vmatprep.subr.mxu0 0.0
      %645 = vmatpush2.msra.mxu0 0.0
      %646 = vmatprep.subr.mxu0 0.0
      %647 = vmatpush2.msra.mxu0 0.0
      %648 = vmatprep.subr.mxu0 0.0
      %649 = vmatpush2.msra.mxu0 0.0
      %650 = vmatprep.subr.mxu0 0.0
      %651 = vmatpush2.msra.mxu0 0.0
      %652 = vmatprep.subr.mxu0 0.0
      %653 = vmatpush2.msra.mxu0 0.0
      %654 = vmatprep.mubr.f32.mxu0 0.0
      %655 = vmatmul.mubr.f32.gmra.mxu0 %v588
      %v656 = vpop.f32.mrf.mxu0
      %v657 = vadd.f32 0.0, %v656
      %v658 = vpop.f32.mrf.mxu0
      %659 = vdwg.mxu0
      %p660 = scmp.lt.s32.totalorder %s20, 0
      %s661 = scalar_select %p660, 1, 0
      %v662 = vstv %s661
      %vm663 = vcmp.eq.s32.totalorder %v662, 1
      %v664 = vsel %vm663, %v657, 0.0
      %vm665 = vcmp.eq.s32.totalorder %v484, 15
      %vm666 = vcmp.eq.s32.totalorder %v485, 15
      %v667 = vrot.slane %v475, 1
      %v668 = vrot.slane %v480, 1
      %vm669 = vcmp.lt.s32.totalorder %v484, 7
      %v670 = vsel %vm669, %v667, %v668
      %v671 = vsel %vm669, %v668, %v667
      %v672 = vlaneseq
      %v673 = vshrl.u32 %v672, 7
      %v674 = vsub.s32 0, %v673
      %v675 = vrot.slane %v664, %v674
      %v676 = vsel %vm665, %v675, %v670
      %v677 = vsel %vm666, %v675, %v671
      %v678 = vadd.f32 %v580, %v391
      %v679 = vadd.f32 %v581, %v396
      %v680 = vadd.f32 %v678, %v676
      %v681 = vadd.f32 %v679, %v677
      %v682 = vld [vmem:[%s2] sm:$0x1]
      %v684 = vlaneseq
      %v685 = vshrl.u32 %v684, 7
      %v686 = vsub.s32 0, %v685
      %v687 = vrot.slane %v682, %v686
      %v689 = vmul.f32 %v680, %v687
      %v690 = vmul.f32 %v681, %v687
      %v691 = vld [vmem:[%s3] sm:$0x1]
      %v693 = vlaneseq
      %v694 = vshrl.u32 %v693, 7
      %v695 = vsub.s32 0, %v694
      %v696 = vrot.slane %v691, %v695
      %v698 = vadd.f32 %v689, %v696
      %v699 = vadd.f32 %v690, %v696
      %v700 = vsub.f32 0.0, %v698
      %v701 = vsub.f32 0.0, %v699
      %v702 = vmul.f32 %v700, 1.442695
      %v703 = vpow.pop %v702
      %v704 = vmul.f32 %v701, 1.442695
      %v705 = vpow.pop %v704
      %v706 = vadd.f32 %v703, 1.0
      %v707 = vadd.f32 %v705, 1.0
      %v708 = vrcp.pop %v706
      %v709 = vrcp.pop %v707
      %v710 = vmul.f32 %v698, %v708
      %v711 = vmul.f32 %v699, %v709
      %712 = vst [vmem:[%s219] sm:$0xff] %v710
      %713 = vst [vmem:[%s219 + $0x8] sm:$0xff] %v711
      %s714 = smul.u32 2, %s20
      %p715 = scmp.lt.s32.totalorder %s19, 1
      %s716 = scalar_select %p715, %s19, 1
      %p717 = scmp.lt.s32.totalorder %s714, 1
      %s718 = scalar_select %p717, %s714, 1
      %s719 = smul.addr %s716, 2
      %s720 = sadd.s32 %s718, %s719
      %s721 = smul.addr %s720, 8
      %s722 = scalar_lea.vmem %s4, %s721
      // Predicated region
      $region37: #{conv_block_pallas_nchw.1} parent=35 // pred_check
        %p723 = pneg %p136
      $region38: #{conv_block_pallas_nchw.1} parent=35 // pred_check_branch
        %725 = sbr.rel (%p723) target = $region40
      $region39: #{conv_block_pallas_nchw.1} parent=35 // pred_region
        %s726 = smul.u32 2, %s20
      $region40: #{conv_block_pallas_nchw.1} parent=35 // pred_fallthru
        _
    $region36: #{conv_block_pallas_nchw.1} parent=5 // pred_fallthru
      _
    %p727 = scmp.le.s32.totalorder 2, %s10
    // Predicated region
    $region41: #{conv_block_pallas_nchw.1} parent=5 // pred_check
      %p728 = pneg %p727
    $region42: #{conv_block_pallas_nchw.1} parent=5 // pred_check_branch
      %730 = sbr.rel (%p728) target = $region44
    $region43: #{conv_block_pallas_nchw.1} parent=5 // pred_region
      %s731 = ssub.s32 %s10, 2
      // Predicated region
      $region45: #{conv_block_pallas_nchw.1} parent=43 // pred_check
        %p732 = pneg %p142
      $region46: #{conv_block_pallas_nchw.1} parent=43 // pred_check_branch
        %734 = sbr.rel (%p732) target = $region48
      $region47: #{conv_block_pallas_nchw.1} parent=43 // pred_region
        %s735 = smul.u32 2, %s22
        %p736 = scmp.lt.s32.totalorder %s21, 1
        %s737 = scalar_select %p736, %s21, 1
        %p738 = scmp.lt.s32.totalorder %s735, 1
        %s739 = scalar_select %p738, %s735, 1
        %s740 = smul.addr %s737, 2
        %s741 = sadd.s32 %s739, %s740
        %s742 = smul.addr %s741, 8
        %s743 = scalar_lea.vmem %s4, %s742
      $region48: #{conv_block_pallas_nchw.1} parent=43 // pred_fallthru
        _
    $region44: #{conv_block_pallas_nchw.1} parent=5 // pred_fallthru
      _
  $region6: #{conv_block_pallas_nchw.1} parent=0 // loop_footer
    %s14 = sadd.s32 1, %s10
  $region7: #{conv_block_pallas_nchw.1} parent=0 // loop_footer_branch
    %9 = sbr.rel target = $region3
  $region8: #{conv_block_pallas_nchw.1} parent=0 // loop_exit
    _

</llo_original>
